<compile_context>
chip_gen: v7x
topology: tpu7x:2x2x1
jax: 0.10.0
libtpu: 0.0.40
codegen_flags: <defaults>
</compile_context>

<pallas_src>
import math

import jax
import jax.numpy as jnp
from jax.experimental import pallas as pl
from jax.experimental.pallas import tpu as pltpu


def _copy_kernel(x_ref, o_ref):
    # Pure lane-dense tile copy; all reshape plumbing lives in the wrapper.
    o_ref[...] = x_ref[...]


def _resolve_out_shape(out_shape, total):
    """Resolve a single -1 dim (torch semantics) and validate the element count."""
    if isinstance(out_shape, int):
        out_shape = (out_shape,)
    out_shape = tuple(int(d) for d in out_shape)
    if any(d == -1 for d in out_shape):
        if sum(1 for d in out_shape if d == -1) != 1:
            raise ValueError("only one -1 dimension is allowed in reshape")
        known = math.prod(d for d in out_shape if d != -1)
        if known == 0 or total % known != 0:
            raise ValueError(
                f"cannot reshape array of size {total} into shape {out_shape}")
        out_shape = tuple(total // known if d == -1 else d for d in out_shape)
    if math.prod(out_shape) != total:
        raise ValueError(
            f"cannot reshape array of size {total} into shape {out_shape}")
    return out_shape


def _device_tuning():
    """Per-generation (block_bytes, vmem_limit_bytes or None) copy tuning."""
    kind = ""
    try:
        kind = jax.devices()[0].device_kind.lower()
    except Exception:  # pragma: no cover - defensive; fall back to safe defaults
        pass
    if "v7" in kind:
        # 8 MiB blocks * 2 arrays * 2 buffers = 32 MiB; raise the scoped limit
        # explicitly (physical VMEM per TC is 64 MiB).
        return 8 << 20, 40 << 20
    if "v6" in kind:
        # 4 MiB blocks * 4 = 16 MiB, fits the 32 MiB default scoped VMEM.
        return 4 << 20, None
    # v5e and anything unknown: 2 MiB blocks * 4 = 8 MiB fits the 16 MiB default.
    return 2 << 20, None


def _choose_cols(total):
    """Pick a lane-dense column count (multiple of 128) dividing `total`."""
    for cols in (1024, 512, 256, 128):
        if total % cols == 0:
            return cols
    return None


def _pick_block_rows(rows, max_block_rows, sub_mult):
    """Largest sub_mult-multiple divisor of rows within ~2x of the target size."""
    if rows <= max_block_rows:
        return rows  # full extent along that dim -> always a legal block dim
    d = (max_block_rows // sub_mult) * sub_mult
    floor = max(sub_mult, (max_block_rows // 2 // sub_mult) * sub_mult)
    while d >= floor:
        if rows % d == 0:
            return d  # uniform blocks, no masked tail
        d -= sub_mult
    return max_block_rows  # fall back: last block is a masked partial tail


def _tiled_copy_2d(x2d, rows, cols, itemsize):
    """Bandwidth-bound Pallas copy of a lane-dense (rows, cols) slab."""
    target_block_bytes, vmem_limit = _device_tuning()

    # Sublane multiple: 8 for 32-bit, 16 for 16-bit, 32 for 8-bit dtypes.
    sub_mult = 8 * max(1, 4 // itemsize)

    max_block_rows = max(sub_mult, target_block_bytes // (cols * itemsize))
    max_block_rows = max(sub_mult, (max_block_rows // sub_mult) * sub_mult)

    block_rows = _pick_block_rows(rows, max_block_rows, sub_mult)
    grid = (pl.cdiv(rows, block_rows),)

    cp_kwargs = dict(dimension_semantics=("parallel",))
    if vmem_limit is not None:
        cp_kwargs["vmem_limit_bytes"] = vmem_limit

    return pl.pallas_call(
        _copy_kernel,
        out_shape=jax.ShapeDtypeStruct((rows, cols), x2d.dtype),
        grid=grid,
        in_specs=[pl.BlockSpec((block_rows, cols), lambda i: (i, 0))],
        out_specs=pl.BlockSpec((block_rows, cols), lambda i: (i, 0)),
        input_output_aliases={0: 0},
        compiler_params=pltpu.CompilerParams(**cp_kwargs),
        cost_estimate=pl.CostEstimate(
            flops=0,
            transcendentals=0,
            bytes_accessed=2 * rows * cols * itemsize),
    )(x2d)


def pallas_reshape(x, out_shape):
    """Equivalent of torch.Tensor.reshape(out_shape); the data copy runs in Pallas."""
    total = int(x.size)
    out_shape = _resolve_out_shape(out_shape, total)

    if total == 0:
        return jnp.reshape(x, out_shape)

    itemsize = jnp.dtype(x.dtype).itemsize
    cols = _choose_cols(total)

    if cols is not None:
        rows = total // cols
        # Metadata-only for a contiguous row-major array: lane-dense 2D view.
        x2d = jnp.reshape(x, (rows, cols))
        y2d = _tiled_copy_2d(x2d, rows, cols, itemsize)
        return jnp.reshape(y2d, out_shape)

    # Element count not a multiple of 128: pad the flat array up to a multiple
    # of 1024, run the same tiled copy, then slice the pad back off.  This
    # avoids a single whole-array VMEM block for large odd-sized tensors.
    padded_total = ((total + 1023) // 1024) * 1024
    x_flat = jnp.reshape(x, (total,))
    x_pad = jnp.pad(x_flat, (0, padded_total - total))
    rows, cols = padded_total // 1024, 1024
    y2d = _tiled_copy_2d(jnp.reshape(x_pad, (rows, cols)), rows, cols, itemsize)
    y_flat = jnp.reshape(y2d, (padded_total,))[:total]
    return jnp.reshape(y_flat, out_shape)


class Reshape:
    """Mirror of the PyTorch module (no parameters)."""

    def __init__(self, out_shape):
        self.out_shape = out_shape

    def __call__(self, x):
        return pallas_reshape(x, self.out_shape)


if __name__ == "__main__":
    key = jax.random.PRNGKey(0)
    # NCHW-style input, as a PyTorch conv feature map would be.
    x = jax.random.normal(key, (2, 4, 16, 16), dtype=jnp.float32)

    out_shape = (2, -1)  # (N, C*H*W); exercise the -1 inference path too
    mod = Reshape(out_shape)

    y = jax.block_until_ready(mod(x))

    # Correctness check against plain JAX (same row-major semantics as torch).
    ref = jnp.reshape(x, (2, 4 * 16 * 16))
    assert y.shape == ref.shape
    assert y.dtype == x.dtype
    assert jnp.array_equal(y, ref)

    # Larger, multi-block case (forces grid > 1; row count chosen so the
    # divisor-based block picker yields uniform blocks with no masked tail).
    x2 = jax.random.normal(jax.random.PRNGKey(1), (8, 16, 96, 128), dtype=jnp.float32)
    y2 = jax.block_until_ready(pallas_reshape(x2, (8, 16 * 96 * 128)))
    assert jnp.array_equal(y2, jnp.reshape(x2, (8, 16 * 96 * 128)))

    # Odd element count (not a multiple of 128): exercises the pad/slice path.
    x3 = jax.random.normal(jax.random.PRNGKey(2), (3, 5, 7), dtype=jnp.float32)
    y3 = jax.block_until_ready(pallas_reshape(x3, (-1,)))
    assert jnp.array_equal(y3, jnp.reshape(x3, (105,)))

    print("KERNEL_OK")
</pallas_src>

<mosaic_0001>
module attributes {stable_mosaic.version = 11 : i64} {
  func.func @_copy_kernel(%arg0: i32, %arg1: memref<2x1024xf32, #tpu.memory_space<vmem>>, %arg2: memref<2x1024xf32, #tpu.memory_space<vmem>>) attributes {dimension_semantics = [#tpu.dimension_semantics<parallel>], iteration_bounds = array<i64: 1>, scalar_prefetch = 0 : i64, scratch_operands = 0 : i64, tpu.core_type = #tpu.core_type<tc>, window_params = [{transform_indices = @transform_0, window_bounds = array<i64: 2, 1024>}, {transform_indices = @transform_1, window_bounds = array<i64: 2, 1024>}]} {
    %c0 = arith.constant 0 : index
    %c0_0 = arith.constant 0 : index
    %0 = vector.load %arg1[%c0, %c0_0] : memref<2x1024xf32, #tpu.memory_space<vmem>>, vector<2x1024xf32>
    %c0_1 = arith.constant 0 : index
    %c0_2 = arith.constant 0 : index
    %1 = vector.load %arg2[%c0_1, %c0_2] : memref<2x1024xf32, #tpu.memory_space<vmem>>, vector<2x1024xf32>
    tpu.vector_store %arg2[%c0_1, %c0_2], %0 {strides = array<i32>} : memref<2x1024xf32, #tpu.memory_space<vmem>>, vector<2x1024xf32>,
    return
  }
  func.func @transform_0(%arg0: i32) -> (i32, i32) {
    %c0_i32 = arith.constant 0 : i32
    %c0_i32_0 = arith.constant 0 : i32
    return %arg0, %c0_i32 : i32, i32
  }
  func.func @transform_1(%arg0: i32) -> (i32, i32) {
    %c0_i32 = arith.constant 0 : i32
    %c0_i32_0 = arith.constant 0 : i32
    return %arg0, %c0_i32 : i32, i32
  }
}

</mosaic_0001>

<llo_original>
// kernel: tpu_custom_call.1
$region0: #{tpu_custom_call.1}
  #allocation0 [shape = 'u32[]', space=smem, size = 0x4, offset = 0x4, fixed_abs, tag = 'smem constant byte address 0x4 - core index']
  #allocation1 [shape = 'u32[144,128]{1,0:T(1,128)}', space=vmem, size = 0x12000, scoped, tag = 'internal scratch']
  %s0 = inlined_call_operand.hbm [shape: f32[2,1024], index: 0, kind: input, shape index: {}, may-alias: {0,1}]
  %s1 = inlined_call_operand.hbm [shape: f32[2,1024], index: 1, kind: output, shape index: {}, may-alias: {0,1}]
  %s2 = sld [smem:[#allocation0]]
  $region18: #{tpu_custom_call.1} parent=0
    _
  %s4 = ssub.s32 1, %s2
  %s5 = scalar_select 0, %s4, %s2
  $region1: #{tpu_custom_call.1} parent=0
    #allocation2 [shape = 'u8[8192]{0}', space=vmem, size = 0x2000, scoped, tag = 'input window, operand 0, single buffered']
    #allocation3 [shape = 's32[1]{0}', space=sflag, size = 0x4, scoped, tag = 'scoped memory for tpu_custom_call.1']
    #allocation4 [shape = 's32[1]{0}', space=sflag, size = 0x4, scoped, tag = 'scoped memory for tpu_custom_call.1']
    #allocation5 [shape = 'u8[8192]{0}', space=vmem, size = 0x2000, scoped, tag = 'output window, operand 0, single buffered']
    %6 = vsyncpa [#allocation3], 0
    %7 = vsyncpa [#allocation4], 0
    // Predicated region
    $region2: #{tpu_custom_call.1} parent=1 // pred_check
      _
    $region3: #{tpu_custom_call.1} parent=1 // pred_check_branch
      %9 = sbr.rel (0) target = $region5
    $region4: #{tpu_custom_call.1} parent=1 // pred_region
      %s11 = ssub.s32 256, 256
      %12 = vsyncadd [#allocation3], %s11
      %s14 = sshll.u32 [#allocation2], 4
      %s15 = int_to_ptr.vmem [resolvable:$true] %s14
      %17 = dma.hbm_to_vmem [thread:$0]  %s0, 256, %s15, [#allocation3]
    $region5: #{tpu_custom_call.1} parent=1 // pred_fallthru
      _
    // Predicated region
    $region6: #{tpu_custom_call.1} parent=1 // pred_check
      _
    $region7: #{tpu_custom_call.1} parent=1 // pred_check_branch
      %19 = sbr.rel (0) target = $region9
    $region8: #{tpu_custom_call.1} parent=1 // pred_region
      %20 = dma.done [#allocation3], 256
    $region9: #{tpu_custom_call.1} parent=1 // pred_fallthru
      _
    %v21 = vld [vmem:[#allocation2] sm:$0xff]
    %v22 = vld [vmem:[#allocation2 + $0x8] sm:$0xff]
    %23 = vst [vmem:[#allocation5] sm:$0xff] %v21
    %24 = vst [vmem:[#allocation5 + $0x8] sm:$0xff] %v22
    // Predicated region
    $region10: #{tpu_custom_call.1} parent=1 // pred_check
      _
    $region11: #{tpu_custom_call.1} parent=1 // pred_check_branch
      %26 = sbr.rel (0) target = $region13
    $region12: #{tpu_custom_call.1} parent=1 // pred_region
      %s28 = ssub.s32 256, 256
      %29 = vsyncadd [#allocation4], %s28
      %s31 = sshll.u32 [#allocation5], 4
      %s32 = int_to_ptr.vmem [resolvable:$true] %s31
      %34 = dma.vmem_to_hbm [thread:$0]  %s32, 256, %s1, [#allocation4]
    $region13: #{tpu_custom_call.1} parent=1 // pred_fallthru
      _
    // Predicated region
    $region14: #{tpu_custom_call.1} parent=1 // pred_check
      _
    $region15: #{tpu_custom_call.1} parent=1 // pred_check_branch
      %36 = sbr.rel (0) target = $region17
    $region16: #{tpu_custom_call.1} parent=1 // pred_region
      %37 = dma.done [#allocation4], 256
    $region17: #{tpu_custom_call.1} parent=1 // pred_fallthru
      _
    %38 = vsyncpa [#allocation3], 1
    %39 = vsyncpa [#allocation4], 1

</llo_original>
